<compile_context>
chip_gen: v7x
topology: tpu7x:2x2x1
jax: 0.10.0
libtpu: 0.0.40
codegen_flags: <defaults>
</compile_context>

<pallas_src>
import functools
import re

import jax
import jax.numpy as jnp
from jax.experimental import pallas as pl
from jax.experimental.pallas import tpu as pltpu


def _round_up(x, m):
    return ((x + m - 1) // m) * m


def _tpu_generation():
    """Best-effort TPU generation (5 / 6 / 7). Defaults to 6 if unknown."""
    try:
        kind = jax.devices()[0].device_kind.lower()
        m = re.search(r"v(\d+)", kind)
        if m:
            return int(m.group(1))
    except Exception:
        pass
    return 6


def _pick_tm(batch, gen):
    """Row tile: 256 on v6e/v7x for big batches (2x256 MXU), else 128-capped.
    On v7x ensure a large batch yields >= 2 grid steps so the 'parallel'
    batch axis shards across both TensorCores; tiny batches stay on one TC."""
    if batch <= 128 or gen < 6:
        return min(128, _round_up(batch, 8))
    tm = 256
    if batch % 256 != 0 and batch % 128 == 0:
        tm = 128  # divides the batch exactly -> no batch padding
    if gen >= 7 and _round_up(batch, tm) // tm < 2:
        tm = 128  # give both v7x TensorCores work
    return tm


def _chunk_vmem_bytes(shapes, tm):
    """VMEM need of one fused chunk: resident bf16 weights (single-buffered),
    f32 biases, double-buffered in/out activation tiles, and the per-layer
    f32 intermediates of the unrolled layer chain."""
    wbytes = sum(kp * np_ * 2 for kp, np_ in shapes)
    bbytes = sum(np_ * 4 for _, np_ in shapes)
    io = 2 * tm * shapes[0][0] * 4 + 2 * tm * shapes[-1][1] * 4
    inter = sum(tm * np_ * 4 for _, np_ in shapes)
    return wbytes + bbytes + io + inter


def _plan_chunks(shapes, tm, budget_bytes):
    """Greedily group consecutive layers so each fused pallas_call's resident
    set fits the per-generation VMEM budget (v7x only has 64 MiB/TC)."""
    chunks = []
    i, n = 0, len(shapes)
    while i < n:
        j = i + 1
        while j < n and _chunk_vmem_bytes(shapes[i:j + 1], tm) <= budget_bytes:
            j += 1
        # TODO(synk): if a single layer alone exceeds the budget, stream its K
        # dimension with pltpu.emit_pipeline instead of holding it resident.
        chunks.append(j - i)
        i = j
    return tuple(chunks)


def _fused_mlp_kernel(*refs, num_layers):
    # refs = (x_ref, w0_ref, b0_ref, ..., w{L-1}_ref, b{L-1}_ref, o_ref)
    # x_ref: (tm, K0p) f32   w_l: (K_lp, N_lp) bf16   b_l: (1, N_lp) f32
    x_ref = refs[0]
    o_ref = refs[1 + 2 * num_layers]

    h = x_ref[...].astype(jnp.float32)
    for l in range(num_layers):                       # static unroll
        w = refs[1 + 2 * l][...]
        b = refs[2 + 2 * l][...]
        y = jnp.dot(h.astype(w.dtype), w, preferred_element_type=jnp.float32)
        y = y + b                                     # f32 epilogue (v5e-safe)
        h = jnp.maximum(y, 0.0)
    o_ref[...] = h.astype(o_ref.dtype)


def _fused_chunk(x_pad, weights, biases, *, tm, vmem_cap):
    """One fused [Linear -> ReLU]* chunk: all chunk weights resident in VMEM
    (single-buffered), activations tiled over the batch."""
    Bp, K0p = x_pad.shape
    num_layers = len(weights)
    N_lastp = weights[-1].shape[1]

    in_specs = [pl.BlockSpec((tm, K0p), lambda i: (i, 0))]
    flat_inputs = [x_pad]
    for w, b in zip(weights, biases):
        Kp, Np = w.shape
        # Constant index_map -> fetched once; Buffered(1) drops the default
        # double buffer so resident weights cost half the VMEM.
        in_specs.append(pl.BlockSpec((Kp, Np), lambda i: (0, 0),
                                     pipeline_mode=pl.Buffered(1)))
        in_specs.append(pl.BlockSpec((1, Np), lambda i: (0, 0),
                                     pipeline_mode=pl.Buffered(1)))
        flat_inputs += [w, b]

    shapes = [tuple(w.shape) for w in weights]
    need = _chunk_vmem_bytes(shapes, tm)
    vmem_limit = int(min(vmem_cap, max(int(need * 1.25) + (1 << 20), 16 << 20)))

    wbytes = sum(kp * np_ * 2 for kp, np_ in shapes)
    bbytes = sum(np_ * 4 for _, np_ in shapes)
    flops = 2 * Bp * sum(kp * np_ for kp, np_ in shapes)
    bytes_accessed = wbytes + bbytes + Bp * K0p * 4 + Bp * N_lastp * 4

    # TODO(synk): for a single-step grid with many layers, a manual per-layer
    # weight prefetch (memory_space=pl.ANY + pltpu.make_async_copy) could
    # overlap layer-l compute with layer-(l+1) weight DMA.
    return pl.pallas_call(
        functools.partial(_fused_mlp_kernel, num_layers=num_layers),
        out_shape=jax.ShapeDtypeStruct((Bp, N_lastp), jnp.float32),
        grid_spec=pltpu.PrefetchScalarGridSpec(
            num_scalar_prefetch=0,
            grid=(Bp // tm,),
            in_specs=in_specs,
            out_specs=pl.BlockSpec((tm, N_lastp), lambda i: (i, 0)),
        ),
        compiler_params=pltpu.CompilerParams(
            dimension_semantics=("parallel",),
            vmem_limit_bytes=vmem_limit,
        ),
        cost_estimate=pl.CostEstimate(flops=flops, transcendentals=0,
                                      bytes_accessed=bytes_accessed),
    )(*flat_inputs)


@functools.partial(jax.jit,
                   static_argnames=("tm", "out_features", "chunk_sizes",
                                    "vmem_cap"))
def mlp_forward(x, weights, biases, *, tm, out_features, chunk_sizes,
                vmem_cap):
    """relu(...relu(relu(x@W0+b0)@W1+b1)...): one dispatch; one (or a few)
    fused pallas_calls. Activations only touch HBM at chunk boundaries."""
    B, K = x.shape
    K0p = weights[0].shape[0]
    Bp = _round_up(B, tm)

    # Pad only when needed (skip the extra HBM pass for aligned shapes).
    if Bp != B or K != K0p:
        x = jnp.pad(x, ((0, Bp - B), (0, K0p - K)))

    h = x
    start = 0
    for n_l in chunk_sizes:
        h = _fused_chunk(h, weights[start:start + n_l],
                         biases[start:start + n_l], tm=tm, vmem_cap=vmem_cap)
        start += n_l

    # Slice only when batch/lane padding actually happened.
    if h.shape[0] != B or h.shape[1] != out_features:
        h = h[:B, :out_features]
    return h


class LinearNet:
    """JAX/Pallas port of apps/deepnat/tmlp.py::LinearNet.

    forward: for each layer: x = relu(linear(x)) — ReLU after every layer,
    including the last, matching the PyTorch reference."""

    def __init__(self, input_size, sizes, output_size, key,
                 compute_dtype=jnp.bfloat16):
        dims = [input_size] + list(sizes) + [output_size]
        self.dims = dims
        self.compute_dtype = compute_dtype
        self.gen = _tpu_generation()
        # Per-TensorCore VMEM: v7x has 64 MiB, v5e/v6e have 128 MiB.
        self.vmem_budget = (48 << 20) if self.gen >= 7 else (96 << 20)
        self.vmem_cap = (56 << 20) if self.gen >= 7 else (100 << 20)

        # Unpadded f32 params (PyTorch nn.Linear default init), kept for
        # reference checks. Weights stored as (in, out) = W.T of PyTorch.
        self.params = []
        for i in range(len(dims) - 1):
            fan_in, fan_out = dims[i], dims[i + 1]
            key, kw, kb = jax.random.split(key, 3)
            bound = 1.0 / (fan_in ** 0.5)
            w = jax.random.uniform(kw, (fan_in, fan_out), jnp.float32,
                                   minval=-bound, maxval=bound)
            b = jax.random.uniform(kb, (fan_out,), jnp.float32,
                                   minval=-bound, maxval=bound)
            self.params.append((w, b))

        # Pre-padded (multiples of 128 -> lane-dense HBM I/O) and pre-cast
        # bf16 weights; zero padding keeps padded lanes exactly zero through
        # every layer. Biases stored as (1, Np) f32.
        # TODO(synk): on v7x, fp8(e4m3) weight storage + per-channel scales in
        # the epilogue would halve weight DMA again; needs accuracy validation.
        w_pad, b_pad = [], []
        for w, b in self.params:
            Kd, Nd = w.shape
            Kp, Np = _round_up(Kd, 128), _round_up(Nd, 128)
            wp = jnp.zeros((Kp, Np), compute_dtype).at[:Kd, :Nd].set(
                w.astype(compute_dtype))
            bp = jnp.zeros((1, Np), jnp.float32).at[:, :Nd].set(b[None, :])
            w_pad.append(wp)
            b_pad.append(bp)
        self.w_pad = tuple(w_pad)
        self.b_pad = tuple(b_pad)
        self._w_shapes = tuple(tuple(w.shape) for w in self.w_pad)

    def forward(self, x):
        B = x.shape[0]
        tm = _pick_tm(B, self.gen)
        chunk_sizes = _plan_chunks(self._w_shapes, tm, self.vmem_budget)
        return mlp_forward(x, self.w_pad, self.b_pad, tm=tm,
                           out_features=self.dims[-1],
                           chunk_sizes=chunk_sizes, vmem_cap=self.vmem_cap)


if __name__ == "__main__":
    key = jax.random.PRNGKey(0)
    key, kx = jax.random.split(key)

    input_size = 16
    hidden_sizes = [32, 64]
    output_size = 8
    batch = 16

    net = LinearNet(input_size, hidden_sizes, output_size, key)
    x = jax.random.normal(kx, (batch, input_size), jnp.float32)

    out = net.forward(x)
    jax.block_until_ready(out)

    # Pure-JAX reference doing the same math (bf16 MXU operands, f32
    # accumulation / bias / ReLU), on the unpadded params.
    # NOTE: bf16 operands deviate slightly from a true f32 PyTorch LinearNet;
    # pass compute_dtype=jnp.float32 to LinearNet for stricter parity.
    ref = x
    for w, b in net.params:
        y = jnp.dot(ref.astype(jnp.bfloat16), w.astype(jnp.bfloat16),
                    preferred_element_type=jnp.float32) + b
        ref = jnp.maximum(y, 0.0)

    assert out.shape == (batch, output_size)
    assert jnp.allclose(out, ref, atol=1e-3, rtol=1e-3), float(
        jnp.max(jnp.abs(out - ref)))

    print("KERNEL_OK")
</pallas_src>

<mosaic_0001>
module attributes {stable_mosaic.version = 11 : i64} {
  func.func @_fused_mlp_kernel(%arg0: i32, %arg1: memref<16x128xf32, #tpu.memory_space<vmem>>, %arg2: memref<128x128xbf16, #tpu.memory_space<vmem>>, %arg3: memref<1x128xf32, #tpu.memory_space<vmem>>, %arg4: memref<128x128xbf16, #tpu.memory_space<vmem>>, %arg5: memref<1x128xf32, #tpu.memory_space<vmem>>, %arg6: memref<128x128xbf16, #tpu.memory_space<vmem>>, %arg7: memref<1x128xf32, #tpu.memory_space<vmem>>, %arg8: memref<16x128xf32, #tpu.memory_space<vmem>>) attributes {dimension_semantics = [#tpu.dimension_semantics<parallel>], iteration_bounds = array<i64: 1>, scalar_prefetch = 0 : i64, scratch_operands = 0 : i64, tpu.core_type = #tpu.core_type<tc>, window_params = [{transform_indices = @transform_0, window_bounds = array<i64: 16, 128>}, {pipeline_mode = #tpu.pipeline_mode<synchronous>, transform_indices = @transform_1, window_bounds = array<i64: 128, 128>}, {pipeline_mode = #tpu.pipeline_mode<synchronous>, transform_indices = @transform_2, window_bounds = array<i64: 1, 128>}, {pipeline_mode = #tpu.pipeline_mode<synchronous>, transform_indices = @transform_3, window_bounds = array<i64: 128, 128>}, {pipeline_mode = #tpu.pipeline_mode<synchronous>, transform_indices = @transform_4, window_bounds = array<i64: 1, 128>}, {pipeline_mode = #tpu.pipeline_mode<synchronous>, transform_indices = @transform_5, window_bounds = array<i64: 128, 128>}, {pipeline_mode = #tpu.pipeline_mode<synchronous>, transform_indices = @transform_6, window_bounds = array<i64: 1, 128>}, {transform_indices = @transform_7, window_bounds = array<i64: 16, 128>}]} {
    %c0 = arith.constant 0 : index
    %c0_0 = arith.constant 0 : index
    %0 = vector.load %arg1[%c0, %c0_0] : memref<16x128xf32, #tpu.memory_space<vmem>>, vector<16x128xf32>
    %c0_1 = arith.constant 0 : index
    %c0_2 = arith.constant 0 : index
    %1 = vector.load %arg2[%c0_1, %c0_2] : memref<128x128xbf16, #tpu.memory_space<vmem>>, vector<128x128xbf16>
    %c0_3 = arith.constant 0 : index
    %c0_4 = arith.constant 0 : index
    %2 = vector.load %arg3[%c0_3, %c0_4] : memref<1x128xf32, #tpu.memory_space<vmem>>, vector<1x128xf32>
    %3 = arith.truncf %0 : vector<16x128xf32> to vector<16x128xbf16>
    %cst = arith.constant dense<0.000000e+00> : vector<16x128xf32>
    %4 = tpu.matmul %3, %1, %cst {dimension_numbers = #tpu.dot_dimension_numbers<[1], [0], [0], [1], [0, 0, 1, 1], [], []>} : vector<16x128xbf16>, vector<128x128xbf16>, vector<16x128xf32> -> vector<16x128xf32>
    %5 = vector.broadcast %2 : vector<1x128xf32> to vector<16x128xf32>
    %6 = arith.addf %4, %5 : vector<16x128xf32>
    %cst_5 = arith.constant 0.000000e+00 : f32
    %7 = vector.broadcast %cst_5 : f32 to vector<16x128xf32>
    %8 = arith.maximumf %6, %7 : vector<16x128xf32>
    %c0_6 = arith.constant 0 : index
    %c0_7 = arith.constant 0 : index
    %9 = vector.load %arg4[%c0_6, %c0_7] : memref<128x128xbf16, #tpu.memory_space<vmem>>, vector<128x128xbf16>
    %c0_8 = arith.constant 0 : index
    %c0_9 = arith.constant 0 : index
    %10 = vector.load %arg5[%c0_8, %c0_9] : memref<1x128xf32, #tpu.memory_space<vmem>>, vector<1x128xf32>
    %11 = arith.truncf %8 : vector<16x128xf32> to vector<16x128xbf16>
    %cst_10 = arith.constant dense<0.000000e+00> : vector<16x128xf32>
    %12 = tpu.matmul %11, %9, %cst_10 {dimension_numbers = #tpu.dot_dimension_numbers<[1], [0], [0], [1], [0, 0, 1, 1], [], []>} : vector<16x128xbf16>, vector<128x128xbf16>, vector<16x128xf32> -> vector<16x128xf32>
    %13 = vector.broadcast %10 : vector<1x128xf32> to vector<16x128xf32>
    %14 = arith.addf %12, %13 : vector<16x128xf32>
    %cst_11 = arith.constant 0.000000e+00 : f32
    %15 = vector.broadcast %cst_11 : f32 to vector<16x128xf32>
    %16 = arith.maximumf %14, %15 : vector<16x128xf32>
    %c0_12 = arith.constant 0 : index
    %c0_13 = arith.constant 0 : index
    %17 = vector.load %arg6[%c0_12, %c0_13] : memref<128x128xbf16, #tpu.memory_space<vmem>>, vector<128x128xbf16>
    %c0_14 = arith.constant 0 : index
    %c0_15 = arith.constant 0 : index
    %18 = vector.load %arg7[%c0_14, %c0_15] : memref<1x128xf32, #tpu.memory_space<vmem>>, vector<1x128xf32>
    %19 = arith.truncf %16 : vector<16x128xf32> to vector<16x128xbf16>
    %cst_16 = arith.constant dense<0.000000e+00> : vector<16x128xf32>
    %20 = tpu.matmul %19, %17, %cst_16 {dimension_numbers = #tpu.dot_dimension_numbers<[1], [0], [0], [1], [0, 0, 1, 1], [], []>} : vector<16x128xbf16>, vector<128x128xbf16>, vector<16x128xf32> -> vector<16x128xf32>
    %21 = vector.broadcast %18 : vector<1x128xf32> to vector<16x128xf32>
    %22 = arith.addf %20, %21 : vector<16x128xf32>
    %cst_17 = arith.constant 0.000000e+00 : f32
    %23 = vector.broadcast %cst_17 : f32 to vector<16x128xf32>
    %24 = arith.maximumf %22, %23 : vector<16x128xf32>
    %c0_18 = arith.constant 0 : index
    %c0_19 = arith.constant 0 : index
    %25 = vector.load %arg8[%c0_18, %c0_19] : memref<16x128xf32, #tpu.memory_space<vmem>>, vector<16x128xf32>
    tpu.vector_store %arg8[%c0_18, %c0_19], %24 {strides = array<i32>} : memref<16x128xf32, #tpu.memory_space<vmem>>, vector<16x128xf32>,
    return
  }
  func.func @transform_0(%arg0: i32) -> (i32, i32) {
    %c0_i32 = arith.constant 0 : i32
    %c0_i32_0 = arith.constant 0 : i32
    return %arg0, %c0_i32 : i32, i32
  }
  func.func @transform_1(%arg0: i32) -> (i32, i32) {
    %c0_i32 = arith.constant 0 : i32
    %c0_i32_0 = arith.constant 0 : i32
    %c0_i32_1 = arith.constant 0 : i32
    return %c0_i32, %c0_i32_0 : i32, i32
  }
  func.func @transform_2(%arg0: i32) -> (i32, i32) {
    %c0_i32 = arith.constant 0 : i32
    %c0_i32_0 = arith.constant 0 : i32
    %c0_i32_1 = arith.constant 0 : i32
    return %c0_i32, %c0_i32_0 : i32, i32
  }
  func.func @transform_3(%arg0: i32) -> (i32, i32) {
    %c0_i32 = arith.constant 0 : i32
    %c0_i32_0 = arith.constant 0 : i32
    %c0_i32_1 = arith.constant 0 : i32
    return %c0_i32, %c0_i32_0 : i32, i32
  }
  func.func @transform_4(%arg0: i32) -> (i32, i32) {
    %c0_i32 = arith.constant 0 : i32
    %c0_i32_0 = arith.constant 0 : i32
    %c0_i32_1 = arith.constant 0 : i32
    return %c0_i32, %c0_i32_0 : i32, i32
  }
  func.func @transform_5(%arg0: i32) -> (i32, i32) {
    %c0_i32 = arith.constant 0 : i32
    %c0_i32_0 = arith.constant 0 : i32
    %c0_i32_1 = arith.constant 0 : i32
    return %c0_i32, %c0_i32_0 : i32, i32
  }
  func.func @transform_6(%arg0: i32) -> (i32, i32) {
    %c0_i32 = arith.constant 0 : i32
    %c0_i32_0 = arith.constant 0 : i32
    %c0_i32_1 = arith.constant 0 : i32
    return %c0_i32, %c0_i32_0 : i32, i32
  }
  func.func @transform_7(%arg0: i32) -> (i32, i32) {
    %c0_i32 = arith.constant 0 : i32
    %c0_i32_0 = arith.constant 0 : i32
    return %arg0, %c0_i32 : i32, i32
  }
}

</mosaic_0001>

<llo_original>
// kernel: mlp_forward.1
$region0: #{mlp_forward.1}
  #allocation0 [shape = 'u32[]', space=smem, size = 0x4, offset = 0x4, fixed_abs, tag = 'smem constant byte address 0x4 - core index']
  #allocation1 [shape = 'u32[144,128]{1,0:T(1,128)}', space=vmem, size = 0x12000, scoped, tag = 'internal scratch']
  %s0 = inlined_call_operand.vmem [shape: f32[16,128], index: 0, kind: input, shape index: {}]
  %s1 = inlined_call_operand.hbm [shape: bf16[128,128], index: 1, kind: input, shape index: {}]
  %s2 = inlined_call_operand.vmem [shape: f32[1,128], index: 2, kind: input, shape index: {}]
  %s3 = inlined_call_operand.hbm [shape: bf16[128,128], index: 3, kind: input, shape index: {}]
  %s4 = inlined_call_operand.vmem [shape: f32[1,128], index: 4, kind: input, shape index: {}]
  %s5 = inlined_call_operand.hbm [shape: bf16[128,128], index: 5, kind: input, shape index: {}]
  %s6 = inlined_call_operand.vmem [shape: f32[1,128], index: 6, kind: input, shape index: {}]
  %s7 = inlined_call_operand.vmem [shape: f32[16,128], index: 7, kind: output, shape index: {}]
  %s8 = sld [smem:[#allocation0]]
  $region50: #{mlp_forward.1} parent=0
    _
  %s10 = ssub.s32 1, %s8
  %s11 = scalar_select 0, %s10, %s8
  $region1: #{mlp_forward.1} parent=0
    #allocation2 [shape = 'u8[32768]{0}', space=vmem, size = 0x8000, scoped, tag = 'input window, operand 1, single buffered']
    #allocation3 [shape = 's32[1]{0}', space=sflag, size = 0x4, scoped, tag = 'scoped memory for mlp_forward.1']
    #allocation4 [shape = 'u8[32768]{0}', space=vmem, size = 0x8000, scoped, tag = 'input window, operand 3, single buffered']
    #allocation5 [shape = 's32[1]{0}', space=sflag, size = 0x4, scoped, tag = 'scoped memory for mlp_forward.1']
    #allocation6 [shape = 'u8[32768]{0}', space=vmem, size = 0x8000, scoped, tag = 'input window, operand 5, single buffered']
    %12 = vsyncpa [#allocation3], 0
    %13 = vsyncpa [#allocation5], 0
    // Predicated region
    $region2: #{mlp_forward.1} parent=1 // pred_check
      _
    $region3: #{mlp_forward.1} parent=1 // pred_check_branch
      %15 = sbr.rel (0) target = $region5
    $region4: #{mlp_forward.1} parent=1 // pred_region
      _
    $region5: #{mlp_forward.1} parent=1 // pred_fallthru
      _
    // Predicated region
    $region6: #{mlp_forward.1} parent=1 // pred_check
      _
    $region7: #{mlp_forward.1} parent=1 // pred_check_branch
      %17 = sbr.rel (0) target = $region9
    $region8: #{mlp_forward.1} parent=1 // pred_region
      %s19 = ssub.s32 1024, 1024
      %20 = vsyncadd [#allocation3], %s19
      %s21 = sshll.u32 [#allocation2], 4
      %s22 = int_to_ptr.vmem [resolvable:$true] %s21
      %27 = dma.hbm_to_vmem [thread:$0]  %s1, 1024, %s22, [#allocation3], 64, 64, 4
    $region9: #{mlp_forward.1} parent=1 // pred_fallthru
      _
    // Predicated region
    $region10: #{mlp_forward.1} parent=1 // pred_check
      _
    $region11: #{mlp_forward.1} parent=1 // pred_check_branch
      %29 = sbr.rel (0) target = $region13
    $region12: #{mlp_forward.1} parent=1 // pred_region
      _
    $region13: #{mlp_forward.1} parent=1 // pred_fallthru
      _
    // Predicated region
    $region14: #{mlp_forward.1} parent=1 // pred_check
      _
    $region15: #{mlp_forward.1} parent=1 // pred_check_branch
      %31 = sbr.rel (0) target = $region17
    $region16: #{mlp_forward.1} parent=1 // pred_region
      %s33 = ssub.s32 1024, 1024
      %34 = vsyncadd [#allocation5], %s33
      %s35 = sshll.u32 [#allocation4], 4
      %s36 = int_to_ptr.vmem [resolvable:$true] %s35
      %41 = dma.hbm_to_vmem [thread:$0]  %s3, 1024, %s36, [#allocation5], 64, 64, 4
    $region17: #{mlp_forward.1} parent=1 // pred_fallthru
      _
    // Predicated region
    $region18: #{mlp_forward.1} parent=1 // pred_check
      _
    $region19: #{mlp_forward.1} parent=1 // pred_check_branch
      %43 = sbr.rel (0) target = $region21
    $region20: #{mlp_forward.1} parent=1 // pred_region
      _
    $region21: #{mlp_forward.1} parent=1 // pred_fallthru
      _
    // Predicated region
    $region22: #{mlp_forward.1} parent=1 // pred_check
      _
    $region23: #{mlp_forward.1} parent=1 // pred_check_branch
      %45 = sbr.rel (0) target = $region25
    $region24: #{mlp_forward.1} parent=1 // pred_region
      %s47 = ssub.s32 1024, 1024
      %48 = vsyncadd [#allocation5], %s47
      %s49 = sshll.u32 [#allocation6], 4
      %s50 = int_to_ptr.vmem [resolvable:$true] %s49
      %55 = dma.hbm_to_vmem [thread:$0]  %s5, 1024, %s50, [#allocation5], 64, 64, 4
    $region25: #{mlp_forward.1} parent=1 // pred_fallthru
      _
    // Predicated region
    $region26: #{mlp_forward.1} parent=1 // pred_check
      _
    $region27: #{mlp_forward.1} parent=1 // pred_check_branch
      %57 = sbr.rel (0) target = $region29
    $region28: #{mlp_forward.1} parent=1 // pred_region
      _
    $region29: #{mlp_forward.1} parent=1 // pred_fallthru
      _
    // Predicated region
    $region30: #{mlp_forward.1} parent=1 // pred_check
      _
    $region31: #{mlp_forward.1} parent=1 // pred_check_branch
      %59 = sbr.rel (0) target = $region33
    $region32: #{mlp_forward.1} parent=1 // pred_region
      %60 = dma.done [#allocation3], 1024
    $region33: #{mlp_forward.1} parent=1 // pred_fallthru
      _
    // Predicated region
    $region34: #{mlp_forward.1} parent=1 // pred_check
      _
    $region35: #{mlp_forward.1} parent=1 // pred_check_branch
      %62 = sbr.rel (0) target = $region37
    $region36: #{mlp_forward.1} parent=1 // pred_region
      %63 = dma.done [#allocation5], 1024
    $region37: #{mlp_forward.1} parent=1 // pred_fallthru
      _
    // Predicated region
    $region38: #{mlp_forward.1} parent=1 // pred_check
      _
    $region39: #{mlp_forward.1} parent=1 // pred_check_branch
      %65 = sbr.rel (0) target = $region41
    $region40: #{mlp_forward.1} parent=1 // pred_region
      %66 = dma.done [#allocation5], 1024
    $region41: #{mlp_forward.1} parent=1 // pred_fallthru
      _
    %v68 = vld [vmem:[%s0] sm:$0xff]
    %v69 = vld [vmem:[%s0 + $0x8] sm:$0xff]
    %v70 = vld [vmem:[#allocation2] sm:$0xf]
    %v71 = vld [vmem:[#allocation2 + $0x4] sm:$0xf]
    %v72 = vld [vmem:[#allocation2 + $0x8] sm:$0xf]
    %v73 = vld [vmem:[#allocation2 + $0xc] sm:$0xf]
    %v74 = vld [vmem:[#allocation2 + $0x10] sm:$0xf]
    %v75 = vld [vmem:[#allocation2 + $0x14] sm:$0xf]
    %v76 = vld [vmem:[#allocation2 + $0x18] sm:$0xf]
    %v77 = vld [vmem:[#allocation2 + $0x1c] sm:$0xf]
    %v78 = vld [vmem:[#allocation2 + $0x20] sm:$0xf]
    %v79 = vld [vmem:[#allocation2 + $0x24] sm:$0xf]
    %v80 = vld [vmem:[#allocation2 + $0x28] sm:$0xf]
    %v81 = vld [vmem:[#allocation2 + $0x2c] sm:$0xf]
    %v82 = vld [vmem:[#allocation2 + $0x30] sm:$0xf]
    %v83 = vld [vmem:[#allocation2 + $0x34] sm:$0xf]
    %v84 = vld [vmem:[#allocation2 + $0x38] sm:$0xf]
    %v85 = vld [vmem:[#allocation2 + $0x3c] sm:$0xf]
    %v86 = vld [vmem:[%s2] sm:$0x1]
    %v87 = vpack.c.bf16 %v69, %v68
    %v89 = vlaneseq
    %v90 = vshrl.u32 %v89, 7
    %v91 = vsub.s32 0, %v90
    %v92 = vrot.slane %v86, %v91
    %v110 = vunpack.c.l.b16 %v70
    %v111 = vunpack.c.l.b16 %v71
    %v112 = vunpack.c.l.b16 %v72
    %v113 = vunpack.c.l.b16 %v73
    %v114 = vunpack.c.l.b16 %v74
    %v115 = vunpack.c.l.b16 %v75
    %v116 = vunpack.c.l.b16 %v76
    %v117 = vunpack.c.l.b16 %v77
    %v118 = vunpack.c.l.b16 %v78
    %v119 = vunpack.c.l.b16 %v79
    %v120 = vunpack.c.l.b16 %v80
    %v121 = vunpack.c.l.b16 %v81
    %v122 = vunpack.c.l.b16 %v82
    %v123 = vunpack.c.l.b16 %v83
    %v124 = vunpack.c.l.b16 %v84
    %v125 = vunpack.c.l.b16 %v85
    %v126 = vpack.c.b16 %v111, %v110
    %v127 = vpack.c.b16 %v113, %v112
    %v128 = vpack.c.b16 %v115, %v114
    %v129 = vpack.c.b16 %v117, %v116
    %v130 = vpack.c.b16 %v119, %v118
    %v131 = vpack.c.b16 %v121, %v120
    %v132 = vpack.c.b16 %v123, %v122
    %v133 = vpack.c.b16 %v125, %v124
    %142 = vmatprep.subr.bf16.mxu0 0
    %143 = vmatpush1.bf16.msra.mxu0 %v126
    %144 = vmatprep.subr.bf16.mxu0 0
    %145 = vmatpush1.bf16.msra.mxu0 %v127
    %146 = vmatprep.subr.bf16.mxu0 0
    %147 = vmatpush1.bf16.msra.mxu0 %v128
    %148 = vmatprep.subr.bf16.mxu0 0
    %149 = vmatpush1.bf16.msra.mxu0 %v129
    %150 = vmatprep.subr.bf16.mxu0 0
    %151 = vmatpush1.bf16.msra.mxu0 %v130
    %152 = vmatprep.subr.bf16.mxu0 0
    %153 = vmatpush1.bf16.msra.mxu0 %v131
    %154 = vmatprep.subr.bf16.mxu0 0
    %155 = vmatpush1.bf16.msra.mxu0 %v132
    %156 = vmatprep.subr.bf16.mxu0 0
    %157 = vmatpush1.bf16.msra.mxu0 %v133
    %158 = vmatprep.subr.bf16.mxu0 0
    %159 = vmatpush1.bf16.msra.mxu0 0
    %160 = vmatprep.subr.bf16.mxu0 0
    %161 = vmatpush1.bf16.msra.mxu0 0
    %162 = vmatprep.subr.bf16.mxu0 0
    %163 = vmatpush1.bf16.msra.mxu0 0
    %164 = vmatprep.subr.bf16.mxu0 0
    %165 = vmatpush1.bf16.msra.mxu0 0
    %166 = vmatprep.subr.bf16.mxu0 0
    %167 = vmatpush1.bf16.msra.mxu0 0
    %168 = vmatprep.subr.bf16.mxu0 0
    %169 = vmatpush1.bf16.msra.mxu0 0
    %170 = vmatprep.subr.bf16.mxu0 0
    %171 = vmatpush1.bf16.msra.mxu0 0
    %172 = vmatprep.subr.bf16.mxu0 0
    %173 = vmatpush1.bf16.msra.mxu0 0
    %174 = vmatprep.mubr.bf16.mxu0 0
    %175 = vmatmul.mubr.bf16.gmra.mrb[0].mxu0 %v87
    %v176 = vpop.f32.mrb[0].mxu0
    %v177 = vadd.f32 %v92, %v176
    %v178 = vpop.f32.mrb[0].mxu0
    %v179 = vpop.f32.mrb[0].mxu0
    %v180 = vadd.f32 %v92, %v179
    %v181 = vpop.f32.mrb[0].mxu0
    %182 = vdwg.mxu0
    %v183 = vmax.f32 %v177, 0.0
    %v184 = vmax.f32 %v180, 0.0
    %v185 = vld [vmem:[#allocation4] sm:$0xf]
    %v186 = vld [vmem:[#allocation4 + $0x4] sm:$0xf]
    %v187 = vld [vmem:[#allocation4 + $0x8] sm:$0xf]
    %v188 = vld [vmem:[#allocation4 + $0xc] sm:$0xf]
    %v189 = vld [vmem:[#allocation4 + $0x10] sm:$0xf]
    %v190 = vld [vmem:[#allocation4 + $0x14] sm:$0xf]
    %v191 = vld [vmem:[#allocation4 + $0x18] sm:$0xf]
    %v192 = vld [vmem:[#allocation4 + $0x1c] sm:$0xf]
    %v193 = vld [vmem:[#allocation4 + $0x20] sm:$0xf]
    %v194 = vld [vmem:[#allocation4 + $0x24] sm:$0xf]
    %v195 = vld [vmem:[#allocation4 + $0x28] sm:$0xf]
    %v196 = vld [vmem:[#allocation4 + $0x2c] sm:$0xf]
    %v197 = vld [vmem:[#allocation4 + $0x30] sm:$0xf]
    %v198 = vld [vmem:[#allocation4 + $0x34] sm:$0xf]
    %v199 = vld [vmem:[#allocation4 + $0x38] sm:$0xf]
    %v200 = vld [vmem:[#allocation4 + $0x3c] sm:$0xf]
    %v201 = vld [vmem:[%s4] sm:$0x1]
    %v202 = vpack.c.bf16 %v184, %v183
    %v204 = vlaneseq
    %v205 = vshrl.u32 %v204, 7
    %v206 = vsub.s32 0, %v205
    %v207 = vrot.slane %v201, %v206
    %v225 = vunpack.c.l.b16 %v185
    %v226 = vunpack.c.l.b16 %v186
    %v227 = vunpack.c.l.b16 %v187
    %v228 = vunpack.c.l.b16 %v188
    %v229 = vunpack.c.l.b16 %v189
    %v230 = vunpack.c.l.b16 %v190
    %v231 = vunpack.c.l.b16 %v191
    %v232 = vunpack.c.l.b16 %v192
    %v233 = vunpack.c.l.b16 %v193
    %v234 = vunpack.c.l.b16 %v194
    %v235 = vunpack.c.l.b16 %v195
    %v236 = vunpack.c.l.b16 %v196
    %v237 = vunpack.c.l.b16 %v197
    %v238 = vunpack.c.l.b16 %v198
    %v239 = vunpack.c.l.b16 %v199
    %v240 = vunpack.c.l.b16 %v200
    %v241 = vpack.c.b16 %v226, %v225
    %v242 = vpack.c.b16 %v228, %v227
    %v243 = vpack.c.b16 %v230, %v229
    %v244 = vpack.c.b16 %v232, %v231
    %v245 = vpack.c.b16 %v234, %v233
    %v246 = vpack.c.b16 %v236, %v235
    %v247 = vpack.c.b16 %v238, %v237
    %v248 = vpack.c.b16 %v240, %v239
    %257 = vmatprep.subr.bf16.mxu0 0
    %258 = vmatpush1.bf16.msra.mxu0 %v241
    %259 = vmatprep.subr.bf16.mxu0 0
    %260 = vmatpush1.bf16.msra.mxu0 %v242
    %261 = vmatprep.subr.bf16.mxu0 0
    %262 = vmatpush1.bf16.msra.mxu0 %v243
    %263 = vmatprep.subr.bf16.mxu0 0
    %264 = vmatpush1.bf16.msra.mxu0 %v244
    %265 = vmatprep.subr.bf16.mxu0 0
    %266 = vmatpush1.bf16.msra.mxu0 %v245
    %267 = vmatprep.subr.bf16.mxu0 0
    %268 = vmatpush1.bf16.msra.mxu0 %v246
    %269 = vmatprep.subr.bf16.mxu0 0
    %270 = vmatpush1.bf16.msra.mxu0 %v247
    %271 = vmatprep.subr.bf16.mxu0 0
    %272 = vmatpush1.bf16.msra.mxu0 %v248
    %273 = vmatprep.subr.bf16.mxu0 0
    %274 = vmatpush1.bf16.msra.mxu0 0
    %275 = vmatprep.subr.bf16.mxu0 0
    %276 = vmatpush1.bf16.msra.mxu0 0
    %277 = vmatprep.subr.bf16.mxu0 0
    %278 = vmatpush1.bf16.msra.mxu0 0
    %279 = vmatprep.subr.bf16.mxu0 0
    %280 = vmatpush1.bf16.msra.mxu0 0
    %281 = vmatprep.subr.bf16.mxu0 0
    %282 = vmatpush1.bf16.msra.mxu0 0
    %283 = vmatprep.subr.bf16.mxu0 0
    %284 = vmatpush1.bf16.msra.mxu0 0
    %285 = vmatprep.subr.bf16.mxu0 0
    %286 = vmatpush1.bf16.msra.mxu0 0
    %287 = vmatprep.subr.bf16.mxu0 0
    %288 = vmatpush1.bf16.msra.mxu0 0
    %289 = vmatprep.mubr.bf16.mxu0 0
    %290 = vmatmul.mubr.bf16.gmra.mrb[0].mxu0 %v202
    %v291 = vpop.f32.mrb[0].mxu0
    %v292 = vadd.f32 %v207, %v291
    %v293 = vpop.f32.mrb[0].mxu0
    %v294 = vpop.f32.mrb[0].mxu0
    %v295 = vadd.f32 %v207, %v294
    %v296 = vpop.f32.mrb[0].mxu0
    %297 = vdwg.mxu0
    %v298 = vmax.f32 %v292, 0.0
    %v299 = vmax.f32 %v295, 0.0
    %v300 = vld [vmem:[#allocation6] sm:$0xf]
    %v301 = vld [vmem:[#allocation6 + $0x4] sm:$0xf]
    %v302 = vld [vmem:[#allocation6 + $0x8] sm:$0xf]
    %v303 = vld [vmem:[#allocation6 + $0xc] sm:$0xf]
    %v304 = vld [vmem:[#allocation6 + $0x10] sm:$0xf]
    %v305 = vld [vmem:[#allocation6 + $0x14] sm:$0xf]
    %v306 = vld [vmem:[#allocation6 + $0x18] sm:$0xf]
    %v307 = vld [vmem:[#allocation6 + $0x1c] sm:$0xf]
    %v308 = vld [vmem:[#allocation6 + $0x20] sm:$0xf]
    %v309 = vld [vmem:[#allocation6 + $0x24] sm:$0xf]
    %v310 = vld [vmem:[#allocation6 + $0x28] sm:$0xf]
    %v311 = vld [vmem:[#allocation6 + $0x2c] sm:$0xf]
    %v312 = vld [vmem:[#allocation6 + $0x30] sm:$0xf]
    %v313 = vld [vmem:[#allocation6 + $0x34] sm:$0xf]
    %v314 = vld [vmem:[#allocation6 + $0x38] sm:$0xf]
    %v315 = vld [vmem:[#allocation6 + $0x3c] sm:$0xf]
    %v316 = vld [vmem:[%s6] sm:$0x1]
    %v317 = vpack.c.bf16 %v299, %v298
    %v319 = vlaneseq
    %v320 = vshrl.u32 %v319, 7
    %v321 = vsub.s32 0, %v320
    %v322 = vrot.slane %v316, %v321
    %v340 = vunpack.c.l.b16 %v300
    %v341 = vunpack.c.l.b16 %v301
    %v342 = vunpack.c.l.b16 %v302
    %v343 = vunpack.c.l.b16 %v303
    %v344 = vunpack.c.l.b16 %v304
    %v345 = vunpack.c.l.b16 %v305
    %v346 = vunpack.c.l.b16 %v306
    %v347 = vunpack.c.l.b16 %v307
    %v348 = vunpack.c.l.b16 %v308
    %v349 = vunpack.c.l.b16 %v309
    %v350 = vunpack.c.l.b16 %v310
    %v351 = vunpack.c.l.b16 %v311
    %v352 = vunpack.c.l.b16 %v312
    %v353 = vunpack.c.l.b16 %v313
    %v354 = vunpack.c.l.b16 %v314
    %v355 = vunpack.c.l.b16 %v315
    %v356 = vpack.c.b16 %v341, %v340
    %v357 = vpack.c.b16 %v343, %v342
    %v358 = vpack.c.b16 %v345, %v344
    %v359 = vpack.c.b16 %v347, %v346
    %v360 = vpack.c.b16 %v349, %v348
    %v361 = vpack.c.b16 %v351, %v350
    %v362 = vpack.c.b16 %v353, %v352
    %v363 = vpack.c.b16 %v355, %v354
    %372 = vmatprep.subr.bf16.mxu0 0
    %373 = vmatpush1.bf16.msra.mxu0 %v356
    %374 = vmatprep.subr.bf16.mxu0 0
    %375 = vmatpush1.bf16.msra.mxu0 %v357
    %376 = vmatprep.subr.bf16.mxu0 0
    %377 = vmatpush1.bf16.msra.mxu0 %v358
    %378 = vmatprep.subr.bf16.mxu0 0
    %379 = vmatpush1.bf16.msra.mxu0 %v359
    %380 = vmatprep.subr.bf16.mxu0 0
    %381 = vmatpush1.bf16.msra.mxu0 %v360
    %382 = vmatprep.subr.bf16.mxu0 0
    %383 = vmatpush1.bf16.msra.mxu0 %v361
    %384 = vmatprep.subr.bf16.mxu0 0
    %385 = vmatpush1.bf16.msra.mxu0 %v362
    %386 = vmatprep.subr.bf16.mxu0 0
    %387 = vmatpush1.bf16.msra.mxu0 %v363
    %388 = vmatprep.subr.bf16.mxu0 0
    %389 = vmatpush1.bf16.msra.mxu0 0
    %390 = vmatprep.subr.bf16.mxu0 0
    %391 = vmatpush1.bf16.msra.mxu0 0
    %392 = vmatprep.subr.bf16.mxu0 0
    %393 = vmatpush1.bf16.msra.mxu0 0
    %394 = vmatprep.subr.bf16.mxu0 0
    %395 = vmatpush1.bf16.msra.mxu0 0
    %396 = vmatprep.subr.bf16.mxu0 0
    %397 = vmatpush1.bf16.msra.mxu0 0
    %398 = vmatprep.subr.bf16.mxu0 0
    %399 = vmatpush1.bf16.msra.mxu0 0
    %400 = vmatprep.subr.bf16.mxu0 0
    %401 = vmatpush1.bf16.msra.mxu0 0
    %402 = vmatprep.subr.bf16.mxu0 0
    %403 = vmatpush1.bf16.msra.mxu0 0
    %404 = vmatprep.mubr.bf16.mxu0 0
    %405 = vmatmul.mubr.bf16.gmra.mrb[0].mxu0 %v317
    %v406 = vpop.f32.mrb[0].mxu0
    %v407 = vadd.f32 %v322, %v406
    %v408 = vpop.f32.mrb[0].mxu0
    %v409 = vpop.f32.mrb[0].mxu0
    %v410 = vadd.f32 %v322, %v409
    %v411 = vpop.f32.mrb[0].mxu0
    %412 = vdwg.mxu0
    %v413 = vmax.f32 %v407, 0.0
    %v414 = vmax.f32 %v410, 0.0
    %415 = vst [vmem:[%s7] sm:$0xff] %v413
    %416 = vst [vmem:[%s7 + $0x8] sm:$0xff] %v414
    // Predicated region
    $region42: #{mlp_forward.1} parent=1 // pred_check
      _
    $region43: #{mlp_forward.1} parent=1 // pred_check_branch
      %418 = sbr.rel (0) target = $region45
    $region44: #{mlp_forward.1} parent=1 // pred_region
      _
    $region45: #{mlp_forward.1} parent=1 // pred_fallthru
      _
    // Predicated region
    $region46: #{mlp_forward.1} parent=1 // pred_check
      _
    $region47: #{mlp_forward.1} parent=1 // pred_check_branch
      %420 = sbr.rel (0) target = $region49
    $region48: #{mlp_forward.1} parent=1 // pred_region
      _
    $region49: #{mlp_forward.1} parent=1 // pred_fallthru
      _
    %421 = vsyncpa [#allocation3], 1
    %422 = vsyncpa [#allocation5], 1

</llo_original>
